<compile_context>
chip_gen: v7x
topology: tpu7x:2x2x1
jax: 0.10.0
libtpu: 0.0.40
codegen_flags: <defaults>
</compile_context>

<pallas_src>
import jax
import jax.numpy as jnp
from jax import lax
from jax.experimental import pallas as pl
from jax.experimental.pallas import tpu as pltpu


_PAD_TOP = 8  # interior of the padded scratch starts on a sublane-tile boundary


def basic_block_kernel(x_ref, w1_ref, s1_ref, b1_ref, w2_ref, s2_ref, b2_ref,
                       out_ref, pad_ref):
    # x_ref:   (Bt, H, W*C)           f32   packed activations, lane = w*C + c
    # w*_ref:  (3, W*C, W*C)          bf16  banded conv weights (kw taps and
    #                                       width zero-padding folded in)
    # s*_ref:  (1, W*C)               f32   BN scale, tiled along w
    # b*_ref:  (1, W*C)               f32   folded BN bias, tiled along w
    # out_ref: (Bt, H, W*C)           f32
    # pad_ref: (Bt, TOP+H+1, W*C)     f32   H-padded source of the kh=0/2 taps;
    #                                       the interior lives at rows TOP..TOP+H-1
    bt, h, wc = x_ref.shape
    top = _PAD_TOP

    # (Re)zero only the two halo rows read by the kh=0 / kh=2 taps.  This must
    # run every grid step: scratch is per-core and steps may be sharded across
    # TensorCores, so a program_id==0 guard would be wrong.
    zrow = jnp.zeros((bt, 1, wc), jnp.float32)
    pad_ref[:, top - 1:top, :] = zrow
    pad_ref[:, top + h:top + h + 1, :] = zrow

    def conv3x3_bn(w_ref, s_ref, b_ref, interior):
        # interior: (Bt, H, WC) f32, already in registers.  The kh=1 tap uses
        # it directly; only the row-shifted kh=0/2 taps read the padded VMEM
        # scratch (f32 -> no packed-sublane misalignment; cast per loaded slab).
        pad_ref[:, top:top + h, :] = interior             # tile-aligned store
        acc = jnp.dot(interior.astype(jnp.bfloat16).reshape(bt * h, wc),
                      w_ref[1], preferred_element_type=jnp.float32)
        for kh in (0, 2):
            r0 = top - 1 + kh
            slab = pad_ref[:, r0:r0 + h, :].reshape(bt * h, wc)
            acc = acc + jnp.dot(slab.astype(jnp.bfloat16), w_ref[kh],
                                preferred_element_type=jnp.float32)
        # BatchNorm in f32 after the matmuls (scale not folded into bf16 weights).
        return acc * s_ref[...] + b_ref[...]

    y1 = jnp.maximum(conv3x3_bn(w1_ref, s1_ref, b1_ref, x_ref[...]), 0.0)
    y2 = conv3x3_bn(w2_ref, s2_ref, b2_ref, y1.reshape(bt, h, wc))

    # Residual + relu: re-read x from the VMEM-resident block here instead of
    # keeping it live across both convs (smaller f32 live set, no spills).
    out = jnp.maximum(y2 + x_ref[...].reshape(bt * h, wc), 0.0)
    out_ref[...] = out.reshape(bt, h, wc).astype(out_ref.dtype)


def _banded_conv_weight(w_oihw, W):
    """Fold the 3 kw taps + width zero-padding into banded matrices.

    w_oihw: (Cout, Cin, 3, 3).  Returns (3, W*Cin, W*Cout) bf16 where, for
    kernel row kh,
        M[kh][w_in*Cin + ci, w_out*Cout + co]
            = w[co, ci, kh, w_in - w_out + 1]   if |w_in - w_out| <= 1
            = 0                                 otherwise.
    Multiplying a packed activation row (lane = w*Cin + ci) by M[kh] performs
    the kw sum of the conv for every output position at once, with the width
    border handled by the missing bands.
    """
    cout, cin = w_oihw.shape[0], w_oihw.shape[1]
    taps = jnp.transpose(w_oihw.astype(jnp.float32), (2, 3, 1, 0))  # (kh,kw,Cin,Cout)
    w_in = jnp.arange(W)[:, None, None, None]
    w_out = jnp.arange(W)[None, None, :, None]
    mats = []
    for kh in range(3):
        m = jnp.zeros((W, cin, W, cout), jnp.float32)
        for kw in range(3):
            band = (w_in == w_out + (kw - 1)).astype(jnp.float32)   # (W,1,W,1)
            m = m + band * taps[kh, kw][None, :, None, :]
        mats.append(m.reshape(W * cin, W * cout))
    return jnp.stack(mats, axis=0).astype(jnp.bfloat16)


def _step_vmem_bytes(bt, h, wc):
    """Per-grid-step VMEM footprint model: double-buffered in/out blocks,
    padded f32 scratch, both (double-buffered) banded weights + scale/bias,
    and ~4 block-sized f32/bf16 compute temporaries (x, y1, acc, bf16 operand)."""
    blk = bt * h * wc * 4
    pad = bt * (_PAD_TOP + h + 1) * wc * 4
    wts = 2 * 2 * (3 * wc * wc * 2 + 2 * wc * 4)
    return 2 * blk + 2 * blk + pad + 4 * blk + wts


def _tpu_topology():
    """(vmem_budget_bytes, multi_tensorcore). Conservative defaults if the
    hardware query is unavailable."""
    vmem_budget = 24 << 20                     # safe on every generation
    multi_tc = False
    try:
        info = pltpu.get_tpu_info()
        cap = int(getattr(info, "vmem_capacity_bytes", 64 << 20))
        vmem_budget = min(vmem_budget, cap // 3)   # leave room for the compiler
    except Exception:
        pass
    try:
        kind = jax.devices()[0].device_kind.lower()
        multi_tc = "v7" in kind                # two TensorCores per chip
    except Exception:
        pass
    return max(vmem_budget, 4 << 20), multi_tc


def _pick_batch_tile(n, h, wc):
    """Images per grid step.

    * Maximize the MXU M dimension (bt*H) — target >= 256 rows per matmul.
    * Split into >=2 grid steps only on multi-TensorCore chips (v7x) AND only
      when every step still keeps bt*H >= 256; on single-TC chips (v5e/v6e)
      fewer, bigger steps are strictly better (per-step overhead ~0.35 us).
    * Respect the modelled per-step VMEM budget.
    """
    budget, multi_tc = _tpu_topology()
    divisors = [d for d in range(1, n + 1) if n % d == 0]
    fits = [d for d in divisors if _step_vmem_bytes(d, h, wc) <= budget]
    bt = max(fits) if fits else 1
    if multi_tc and bt == n and n > 1:
        for d in sorted(divisors, reverse=True):
            if n // d >= 2 and d * h >= 256 and _step_vmem_bytes(d, h, wc) <= budget:
                bt = d
                break
    return bt


@jax.jit
def basic_block_forward(x_nchw, params, eps=1e-5):
    """BasicBlock forward. x_nchw: (N, C, H, W) float32. Returns (N, C, H, W)."""
    N, C, H, W = x_nchw.shape
    w1, w2 = params["w1"], params["w2"]                    # (C, C, 3, 3) OIHW
    assert w1.shape[0] == C and w2.shape[0] == C, \
        "identity add requires planes == inplanes (stride=1, no downsample)"

    # Inference-mode BatchNorm: per-channel scale + bias applied in f32 inside
    # the kernel, after each conv's matmuls.
    s1 = params["g1"] / jnp.sqrt(params["v1"] + eps)
    s2 = params["g2"] / jnp.sqrt(params["v2"] + eps)
    b1 = params["b1"] - params["m1"] * s1
    b2 = params["b2"] - params["m2"] * s2

    wc = W * C
    w1_b = _banded_conv_weight(w1, W)                      # (3, W*C, W*C) bf16
    w2_b = _banded_conv_weight(w2, W)
    s1_p = jnp.tile(s1, W).reshape(1, wc).astype(jnp.float32)   # lane = w*C + c
    s2_p = jnp.tile(s2, W).reshape(1, wc).astype(jnp.float32)
    b1_p = jnp.tile(b1, W).reshape(1, wc).astype(jnp.float32)
    b2_p = jnp.tile(b2, W).reshape(1, wc).astype(jnp.float32)

    # NCHW -> lane-dense packed (N, H, W*C).  An NHWC/packed-native caller
    # would skip this transpose and the one on the way out (at small sizes
    # these XLA layout shuffles, not the kernel, dominate wall clock).
    x_packed = jnp.transpose(x_nchw, (0, 2, 3, 1)).reshape(N, H, wc)

    bt = _pick_batch_tile(N, H, wc)
    vmem_limit = int(min(48 << 20, max(32 << 20, int(_step_vmem_bytes(bt, H, wc) * 1.5))))

    out_packed = pl.pallas_call(
        basic_block_kernel,
        out_shape=jax.ShapeDtypeStruct((N, H, wc), x_nchw.dtype),
        grid_spec=pltpu.PrefetchScalarGridSpec(
            num_scalar_prefetch=0,
            grid=(N // bt,),
            in_specs=[
                pl.BlockSpec((bt, H, wc), lambda n: (n, 0, 0)),
                pl.BlockSpec((3, wc, wc), lambda n: (0, 0, 0)),
                pl.BlockSpec((1, wc), lambda n: (0, 0)),
                pl.BlockSpec((1, wc), lambda n: (0, 0)),
                pl.BlockSpec((3, wc, wc), lambda n: (0, 0, 0)),
                pl.BlockSpec((1, wc), lambda n: (0, 0)),
                pl.BlockSpec((1, wc), lambda n: (0, 0)),
            ],
            out_specs=pl.BlockSpec((bt, H, wc), lambda n: (n, 0, 0)),
            scratch_shapes=[pltpu.VMEM((bt, _PAD_TOP + H + 1, wc), jnp.float32)],
        ),
        compiler_params=pltpu.CompilerParams(
            dimension_semantics=("parallel",),
            vmem_limit_bytes=vmem_limit),
    )(x_packed, w1_b, s1_p, b1_p, w2_b, s2_p, b2_p)

    return jnp.transpose(out_packed.reshape(N, H, W, C), (0, 3, 1, 2))


def basic_block_reference(x_nchw, params, eps=1e-5):
    """Pure-JAX reference (NCHW, lax.conv, f32) for validation."""
    def conv3x3(x, w):
        return lax.conv_general_dilated(
            x, w, window_strides=(1, 1), padding=((1, 1), (1, 1)),
            dimension_numbers=("NCHW", "OIHW", "NCHW"),
            precision=lax.Precision.HIGHEST)

    def bn(x, g, b, m, v):
        s = g / jnp.sqrt(v + eps)
        return x * s[None, :, None, None] + (b - m * s)[None, :, None, None]

    out = conv3x3(x_nchw, params["w1"])
    out = jnp.maximum(bn(out, params["g1"], params["b1"], params["m1"], params["v1"]), 0.0)
    out = conv3x3(out, params["w2"])
    out = bn(out, params["g2"], params["b2"], params["m2"], params["v2"])
    return jnp.maximum(out + x_nchw, 0.0)


if __name__ == "__main__":
    # inplanes = planes = 8, stride = 1; W*C = 128 -> fully lane-dense packing.
    N, C, H, W = 2, 8, 16, 16
    key = jax.random.PRNGKey(0)
    ks = jax.random.split(key, 11)

    x = jax.random.normal(ks[0], (N, C, H, W), jnp.float32)
    params = {
        "w1": jax.random.normal(ks[1], (C, C, 3, 3), jnp.float32) * 0.1,
        "w2": jax.random.normal(ks[2], (C, C, 3, 3), jnp.float32) * 0.1,
        "g1": 1.0 + 0.1 * jax.random.normal(ks[3], (C,), jnp.float32),
        "b1": 0.1 * jax.random.normal(ks[4], (C,), jnp.float32),
        "m1": 0.1 * jax.random.normal(ks[5], (C,), jnp.float32),
        "v1": 1.0 + 0.1 * jax.random.uniform(ks[6], (C,), jnp.float32),
        "g2": 1.0 + 0.1 * jax.random.normal(ks[7], (C,), jnp.float32),
        "b2": 0.1 * jax.random.normal(ks[8], (C,), jnp.float32),
        "m2": 0.1 * jax.random.normal(ks[9], (C,), jnp.float32),
        "v2": 1.0 + 0.1 * jax.random.uniform(ks[10], (C,), jnp.float32),
    }

    out = jax.block_until_ready(basic_block_forward(x, params))
    ref = jax.block_until_ready(basic_block_reference(x, params))

    assert out.shape == x.shape and out.dtype == x.dtype
    # Kernel uses bf16 MXU operands (f32 accumulation, f32 BN/residual), so
    # compare against the f32 reference with a loosened tolerance.
    if not jnp.allclose(out, ref, atol=3e-2, rtol=3e-2):
        raise AssertionError("Pallas BasicBlock output mismatch vs JAX reference")
    print("KERNEL_OK")
</pallas_src>

<mosaic_0001>
module attributes {stable_mosaic.version = 11 : i64} {
  func.func @basic_block_kernel(%arg0: i32, %arg1: memref<2x16x128xf32, #tpu.memory_space<vmem>>, %arg2: memref<3x128x128xbf16, #tpu.memory_space<vmem>>, %arg3: memref<1x128xf32, #tpu.memory_space<vmem>>, %arg4: memref<1x128xf32, #tpu.memory_space<vmem>>, %arg5: memref<3x128x128xbf16, #tpu.memory_space<vmem>>, %arg6: memref<1x128xf32, #tpu.memory_space<vmem>>, %arg7: memref<1x128xf32, #tpu.memory_space<vmem>>, %arg8: memref<2x16x128xf32, #tpu.memory_space<vmem>>, %arg9: memref<2x25x128xf32, #tpu.memory_space<vmem>>) attributes {dimension_semantics = [#tpu.dimension_semantics<parallel>], iteration_bounds = array<i64: 1>, scalar_prefetch = 0 : i64, scratch_operands = 1 : i64, tpu.core_type = #tpu.core_type<tc>, window_params = [{transform_indices = @transform_0, window_bounds = array<i64: 2, 16, 128>}, {pipeline_mode = #tpu.pipeline_mode<synchronous>, transform_indices = @transform_1, window_bounds = array<i64: 3, 128, 128>}, {pipeline_mode = #tpu.pipeline_mode<synchronous>, transform_indices = @transform_2, window_bounds = array<i64: 1, 128>}, {pipeline_mode = #tpu.pipeline_mode<synchronous>, transform_indices = @transform_3, window_bounds = array<i64: 1, 128>}, {pipeline_mode = #tpu.pipeline_mode<synchronous>, transform_indices = @transform_4, window_bounds = array<i64: 3, 128, 128>}, {pipeline_mode = #tpu.pipeline_mode<synchronous>, transform_indices = @transform_5, window_bounds = array<i64: 1, 128>}, {pipeline_mode = #tpu.pipeline_mode<synchronous>, transform_indices = @transform_6, window_bounds = array<i64: 1, 128>}, {transform_indices = @transform_7, window_bounds = array<i64: 2, 16, 128>}]} {
    %cst = arith.constant 0.000000e+00 : f32
    %0 = vector.broadcast %cst : f32 to vector<2x1x128xf32>
    %c0 = arith.constant 0 : index
    %c7 = arith.constant 7 : index
    %c0_0 = arith.constant 0 : index
    %1 = vector.load %arg9[%c0, %c7, %c0_0] : memref<2x25x128xf32, #tpu.memory_space<vmem>>, vector<2x1x128xf32>
    tpu.vector_store %arg9[%c0, %c7, %c0_0], %0 {strides = array<i32>} : memref<2x25x128xf32, #tpu.memory_space<vmem>>, vector<2x1x128xf32>,
    %c0_1 = arith.constant 0 : index
    %c24 = arith.constant 24 : index
    %c0_2 = arith.constant 0 : index
    %2 = vector.load %arg9[%c0_1, %c24, %c0_2] : memref<2x25x128xf32, #tpu.memory_space<vmem>>, vector<2x1x128xf32>
    tpu.vector_store %arg9[%c0_1, %c24, %c0_2], %0 {strides = array<i32>} : memref<2x25x128xf32, #tpu.memory_space<vmem>>, vector<2x1x128xf32>,
    %c0_3 = arith.constant 0 : index
    %c0_4 = arith.constant 0 : index
    %c0_5 = arith.constant 0 : index
    %3 = vector.load %arg1[%c0_3, %c0_4, %c0_5] : memref<2x16x128xf32, #tpu.memory_space<vmem>>, vector<2x16x128xf32>
    %c0_6 = arith.constant 0 : index
    %c8 = arith.constant 8 : index
    %c0_7 = arith.constant 0 : index
    %4 = vector.load %arg9[%c0_6, %c8, %c0_7] : memref<2x25x128xf32, #tpu.memory_space<vmem>>, vector<2x16x128xf32>
    tpu.vector_store %arg9[%c0_6, %c8, %c0_7], %3 {strides = array<i32>} : memref<2x25x128xf32, #tpu.memory_space<vmem>>, vector<2x16x128xf32>,
    %5 = arith.truncf %3 : vector<2x16x128xf32> to vector<2x16x128xbf16>
    %6 = vector.shape_cast %5 : vector<2x16x128xbf16> to vector<32x128xbf16>
    %c1 = arith.constant 1 : index
    %c0_8 = arith.constant 0 : index
    %c0_9 = arith.constant 0 : index
    %7 = vector.load %arg2[%c1, %c0_8, %c0_9] : memref<3x128x128xbf16, #tpu.memory_space<vmem>>, vector<1x128x128xbf16>
    %8 = vector.shape_cast %7 : vector<1x128x128xbf16> to vector<128x128xbf16>
    %cst_10 = arith.constant dense<0.000000e+00> : vector<32x128xf32>
    %9 = tpu.matmul %6, %8, %cst_10 {dimension_numbers = #tpu.dot_dimension_numbers<[1], [0], [0], [1], [0, 0, 1, 1], [], []>} : vector<32x128xbf16>, vector<128x128xbf16>, vector<32x128xf32> -> vector<32x128xf32>
    %c0_11 = arith.constant 0 : index
    %c7_12 = arith.constant 7 : index
    %c0_13 = arith.constant 0 : index
    %10 = vector.load %arg9[%c0_11, %c7_12, %c0_13] : memref<2x25x128xf32, #tpu.memory_space<vmem>>, vector<2x16x128xf32>
    %11 = vector.shape_cast %10 : vector<2x16x128xf32> to vector<32x128xf32>
    %12 = arith.truncf %11 : vector<32x128xf32> to vector<32x128xbf16>
    %c0_14 = arith.constant 0 : index
    %c0_15 = arith.constant 0 : index
    %c0_16 = arith.constant 0 : index
    %13 = vector.load %arg2[%c0_14, %c0_15, %c0_16] : memref<3x128x128xbf16, #tpu.memory_space<vmem>>, vector<1x128x128xbf16>
    %14 = vector.shape_cast %13 : vector<1x128x128xbf16> to vector<128x128xbf16>
    %cst_17 = arith.constant dense<0.000000e+00> : vector<32x128xf32>
    %15 = tpu.matmul %12, %14, %cst_17 {dimension_numbers = #tpu.dot_dimension_numbers<[1], [0], [0], [1], [0, 0, 1, 1], [], []>} : vector<32x128xbf16>, vector<128x128xbf16>, vector<32x128xf32> -> vector<32x128xf32>
    %16 = arith.addf %9, %15 : vector<32x128xf32>
    %c0_18 = arith.constant 0 : index
    %c9 = arith.constant 9 : index
    %c0_19 = arith.constant 0 : index
    %17 = vector.load %arg9[%c0_18, %c9, %c0_19] : memref<2x25x128xf32, #tpu.memory_space<vmem>>, vector<2x16x128xf32>
    %18 = vector.shape_cast %17 : vector<2x16x128xf32> to vector<32x128xf32>
    %19 = arith.truncf %18 : vector<32x128xf32> to vector<32x128xbf16>
    %c2 = arith.constant 2 : index
    %c0_20 = arith.constant 0 : index
    %c0_21 = arith.constant 0 : index
    %20 = vector.load %arg2[%c2, %c0_20, %c0_21] : memref<3x128x128xbf16, #tpu.memory_space<vmem>>, vector<1x128x128xbf16>
    %21 = vector.shape_cast %20 : vector<1x128x128xbf16> to vector<128x128xbf16>
    %cst_22 = arith.constant dense<0.000000e+00> : vector<32x128xf32>
    %22 = tpu.matmul %19, %21, %cst_22 {dimension_numbers = #tpu.dot_dimension_numbers<[1], [0], [0], [1], [0, 0, 1, 1], [], []>} : vector<32x128xbf16>, vector<128x128xbf16>, vector<32x128xf32> -> vector<32x128xf32>
    %23 = arith.addf %16, %22 : vector<32x128xf32>
    %c0_23 = arith.constant 0 : index
    %c0_24 = arith.constant 0 : index
    %24 = vector.load %arg3[%c0_23, %c0_24] : memref<1x128xf32, #tpu.memory_space<vmem>>, vector<1x128xf32>
    %25 = vector.broadcast %24 : vector<1x128xf32> to vector<32x128xf32>
    %26 = arith.mulf %23, %25 : vector<32x128xf32>
    %c0_25 = arith.constant 0 : index
    %c0_26 = arith.constant 0 : index
    %27 = vector.load %arg4[%c0_25, %c0_26] : memref<1x128xf32, #tpu.memory_space<vmem>>, vector<1x128xf32>
    %28 = vector.broadcast %27 : vector<1x128xf32> to vector<32x128xf32>
    %29 = arith.addf %26, %28 : vector<32x128xf32>
    %cst_27 = arith.constant 0.000000e+00 : f32
    %30 = vector.broadcast %cst_27 : f32 to vector<32x128xf32>
    %31 = arith.maximumf %29, %30 : vector<32x128xf32>
    %32 = vector.shape_cast %31 : vector<32x128xf32> to vector<2x16x128xf32>
    %c0_28 = arith.constant 0 : index
    %c8_29 = arith.constant 8 : index
    %c0_30 = arith.constant 0 : index
    %33 = vector.load %arg9[%c0_28, %c8_29, %c0_30] : memref<2x25x128xf32, #tpu.memory_space<vmem>>, vector<2x16x128xf32>
    tpu.vector_store %arg9[%c0_28, %c8_29, %c0_30], %32 {strides = array<i32>} : memref<2x25x128xf32, #tpu.memory_space<vmem>>, vector<2x16x128xf32>,
    %34 = arith.truncf %32 : vector<2x16x128xf32> to vector<2x16x128xbf16>
    %35 = vector.shape_cast %34 : vector<2x16x128xbf16> to vector<32x128xbf16>
    %c1_31 = arith.constant 1 : index
    %c0_32 = arith.constant 0 : index
    %c0_33 = arith.constant 0 : index
    %36 = vector.load %arg5[%c1_31, %c0_32, %c0_33] : memref<3x128x128xbf16, #tpu.memory_space<vmem>>, vector<1x128x128xbf16>
    %37 = vector.shape_cast %36 : vector<1x128x128xbf16> to vector<128x128xbf16>
    %cst_34 = arith.constant dense<0.000000e+00> : vector<32x128xf32>
    %38 = tpu.matmul %35, %37, %cst_34 {dimension_numbers = #tpu.dot_dimension_numbers<[1], [0], [0], [1], [0, 0, 1, 1], [], []>} : vector<32x128xbf16>, vector<128x128xbf16>, vector<32x128xf32> -> vector<32x128xf32>
    %c0_35 = arith.constant 0 : index
    %c7_36 = arith.constant 7 : index
    %c0_37 = arith.constant 0 : index
    %39 = vector.load %arg9[%c0_35, %c7_36, %c0_37] : memref<2x25x128xf32, #tpu.memory_space<vmem>>, vector<2x16x128xf32>
    %40 = vector.shape_cast %39 : vector<2x16x128xf32> to vector<32x128xf32>
    %41 = arith.truncf %40 : vector<32x128xf32> to vector<32x128xbf16>
    %c0_38 = arith.constant 0 : index
    %c0_39 = arith.constant 0 : index
    %c0_40 = arith.constant 0 : index
    %42 = vector.load %arg5[%c0_38, %c0_39, %c0_40] : memref<3x128x128xbf16, #tpu.memory_space<vmem>>, vector<1x128x128xbf16>
    %43 = vector.shape_cast %42 : vector<1x128x128xbf16> to vector<128x128xbf16>
    %cst_41 = arith.constant dense<0.000000e+00> : vector<32x128xf32>
    %44 = tpu.matmul %41, %43, %cst_41 {dimension_numbers = #tpu.dot_dimension_numbers<[1], [0], [0], [1], [0, 0, 1, 1], [], []>} : vector<32x128xbf16>, vector<128x128xbf16>, vector<32x128xf32> -> vector<32x128xf32>
    %45 = arith.addf %38, %44 : vector<32x128xf32>
    %c0_42 = arith.constant 0 : index
    %c9_43 = arith.constant 9 : index
    %c0_44 = arith.constant 0 : index
    %46 = vector.load %arg9[%c0_42, %c9_43, %c0_44] : memref<2x25x128xf32, #tpu.memory_space<vmem>>, vector<2x16x128xf32>
    %47 = vector.shape_cast %46 : vector<2x16x128xf32> to vector<32x128xf32>
    %48 = arith.truncf %47 : vector<32x128xf32> to vector<32x128xbf16>
    %c2_45 = arith.constant 2 : index
    %c0_46 = arith.constant 0 : index
    %c0_47 = arith.constant 0 : index
    %49 = vector.load %arg5[%c2_45, %c0_46, %c0_47] : memref<3x128x128xbf16, #tpu.memory_space<vmem>>, vector<1x128x128xbf16>
    %50 = vector.shape_cast %49 : vector<1x128x128xbf16> to vector<128x128xbf16>
    %cst_48 = arith.constant dense<0.000000e+00> : vector<32x128xf32>
    %51 = tpu.matmul %48, %50, %cst_48 {dimension_numbers = #tpu.dot_dimension_numbers<[1], [0], [0], [1], [0, 0, 1, 1], [], []>} : vector<32x128xbf16>, vector<128x128xbf16>, vector<32x128xf32> -> vector<32x128xf32>
    %52 = arith.addf %45, %51 : vector<32x128xf32>
    %c0_49 = arith.constant 0 : index
    %c0_50 = arith.constant 0 : index
    %53 = vector.load %arg6[%c0_49, %c0_50] : memref<1x128xf32, #tpu.memory_space<vmem>>, vector<1x128xf32>
    %54 = vector.broadcast %53 : vector<1x128xf32> to vector<32x128xf32>
    %55 = arith.mulf %52, %54 : vector<32x128xf32>
    %c0_51 = arith.constant 0 : index
    %c0_52 = arith.constant 0 : index
    %56 = vector.load %arg7[%c0_51, %c0_52] : memref<1x128xf32, #tpu.memory_space<vmem>>, vector<1x128xf32>
    %57 = vector.broadcast %56 : vector<1x128xf32> to vector<32x128xf32>
    %58 = arith.addf %55, %57 : vector<32x128xf32>
    %c0_53 = arith.constant 0 : index
    %c0_54 = arith.constant 0 : index
    %c0_55 = arith.constant 0 : index
    %59 = vector.load %arg1[%c0_53, %c0_54, %c0_55] : memref<2x16x128xf32, #tpu.memory_space<vmem>>, vector<2x16x128xf32>
    %60 = vector.shape_cast %59 : vector<2x16x128xf32> to vector<32x128xf32>
    %61 = arith.addf %58, %60 : vector<32x128xf32>
    %cst_56 = arith.constant 0.000000e+00 : f32
    %62 = vector.broadcast %cst_56 : f32 to vector<32x128xf32>
    %63 = arith.maximumf %61, %62 : vector<32x128xf32>
    %64 = vector.shape_cast %63 : vector<32x128xf32> to vector<2x16x128xf32>
    %c0_57 = arith.constant 0 : index
    %c0_58 = arith.constant 0 : index
    %c0_59 = arith.constant 0 : index
    %65 = vector.load %arg8[%c0_57, %c0_58, %c0_59] : memref<2x16x128xf32, #tpu.memory_space<vmem>>, vector<2x16x128xf32>
    tpu.vector_store %arg8[%c0_57, %c0_58, %c0_59], %64 {strides = array<i32>} : memref<2x16x128xf32, #tpu.memory_space<vmem>>, vector<2x16x128xf32>,
    return
  }
  func.func @transform_0(%arg0: i32) -> (i32, i32, i32) {
    %c0_i32 = arith.constant 0 : i32
    %c0_i32_0 = arith.constant 0 : i32
    %c0_i32_1 = arith.constant 0 : i32
    return %arg0, %c0_i32, %c0_i32_0 : i32, i32, i32
  }
  func.func @transform_1(%arg0: i32) -> (i32, i32, i32) {
    %c0_i32 = arith.constant 0 : i32
    %c0_i32_0 = arith.constant 0 : i32
    %c0_i32_1 = arith.constant 0 : i32
    %c0_i32_2 = arith.constant 0 : i32
    return %c0_i32, %c0_i32_0, %c0_i32_1 : i32, i32, i32
  }
  func.func @transform_2(%arg0: i32) -> (i32, i32) {
    %c0_i32 = arith.constant 0 : i32
    %c0_i32_0 = arith.constant 0 : i32
    %c0_i32_1 = arith.constant 0 : i32
    return %c0_i32, %c0_i32_0 : i32, i32
  }
  func.func @transform_3(%arg0: i32) -> (i32, i32) {
    %c0_i32 = arith.constant 0 : i32
    %c0_i32_0 = arith.constant 0 : i32
    %c0_i32_1 = arith.constant 0 : i32
    return %c0_i32, %c0_i32_0 : i32, i32
  }
  func.func @transform_4(%arg0: i32) -> (i32, i32, i32) {
    %c0_i32 = arith.constant 0 : i32
    %c0_i32_0 = arith.constant 0 : i32
    %c0_i32_1 = arith.constant 0 : i32
    %c0_i32_2 = arith.constant 0 : i32
    return %c0_i32, %c0_i32_0, %c0_i32_1 : i32, i32, i32
  }
  func.func @transform_5(%arg0: i32) -> (i32, i32) {
    %c0_i32 = arith.constant 0 : i32
    %c0_i32_0 = arith.constant 0 : i32
    %c0_i32_1 = arith.constant 0 : i32
    return %c0_i32, %c0_i32_0 : i32, i32
  }
  func.func @transform_6(%arg0: i32) -> (i32, i32) {
    %c0_i32 = arith.constant 0 : i32
    %c0_i32_0 = arith.constant 0 : i32
    %c0_i32_1 = arith.constant 0 : i32
    return %c0_i32, %c0_i32_0 : i32, i32
  }
  func.func @transform_7(%arg0: i32) -> (i32, i32, i32) {
    %c0_i32 = arith.constant 0 : i32
    %c0_i32_0 = arith.constant 0 : i32
    %c0_i32_1 = arith.constant 0 : i32
    return %arg0, %c0_i32, %c0_i32_0 : i32, i32, i32
  }
}

</mosaic_0001>

<llo_original>
// kernel: tile.23
$region0: #{tile.23}
  #allocation0 [shape = 's32[1]{0}', space=sflag, size = 0x4, scoped, tag = 'scoped memory for tile.23']
  %s0 = inlined_call_operand.vmem [shape: f32[8], index: 0, kind: input, shape index: {}]
  %s1 = inlined_call_operand.vmem [shape: f32[16,8], index: 1, kind: output, shape index: {}]
  // Predicated region
  $region2: #{tile.23} parent=0 // pred_check
    _
  $region3: #{tile.23} parent=0 // pred_check_branch
    %3 = sbr.rel (0) target = $region5
  $region4: #{tile.23} parent=0 // pred_region
    _
  $region5: #{tile.23} parent=0 // pred_fallthru
    _
  %v4 = vld [vmem:[%s0] ss:$0 sm:$0xff]
  %5 = vst [vmem:[%s1] sm:$0xff] %v4
  %s6 = scalar_lea.vmem %s1, 8
  %7 = vst [vmem:[%s6] sm:$0xff] %v4

// kernel: tile.24
$region0: #{tile.24}
  %s0 = inlined_call_operand.vmem [shape: f32[16,8], index: 0, kind: input, shape index: {}]
  %s1 = inlined_call_operand.vmem [shape: f32[1,128], index: 1, kind: output, shape index: {}]
  $region1: #{tile.24} parent=0
    #allocation0 [shape = 'u8[4096]{0}', space=vmem, size = 0x1000, scoped, tag = 'scoped mem for output reshape']
    %v2 = vld [vmem:[%s0] sm:$0x1]
    %vm3 = vcmask 64512
    %4 = vst.msk [vmem:[#allocation0] sm:$0x1] %vm3, %v2
    %s5 = scalar_lea.vmem %s0, 15
    %v6 = vld [vmem:[%s5] sm:$0x1]
    %7 = vrot.lane.b32.xlu0 %v6, 120
    %v8 = vpop.permute.xlu0 %7
    %vm9 = vcmask 1048512
    %10 = vst.msk [vmem:[#allocation0] sm:$0x1] %vm9, %v8
    %s11 = scalar_lea.vmem %s0, 14
    %v12 = vld [vmem:[%s11] sm:$0x1]
    %13 = vrot.lane.b32.xlu0 %v12, 112
    %v14 = vpop.permute.xlu0 %13
    %vm15 = vcmask 982912
    %16 = vst.msk [vmem:[#allocation0] sm:$0x1] %vm15, %v14
    %s17 = scalar_lea.vmem %s0, 13
    %v18 = vld [vmem:[%s17] sm:$0x1]
    %19 = vrot.lane.b32.xlu0 %v18, 104
    %v20 = vpop.permute.xlu0 %19
    %vm21 = vcmask 917312
    %22 = vst.msk [vmem:[#allocation0] sm:$0x1] %vm21, %v20
    %s23 = scalar_lea.vmem %s0, 12
    %v24 = vld [vmem:[%s23] sm:$0x1]
    %25 = vrot.lane.b32.xlu0 %v24, 96
    %v26 = vpop.permute.xlu0 %25
    %vm27 = vcmask 851712
    %28 = vst.msk [vmem:[#allocation0] sm:$0x1] %vm27, %v26
    %s29 = scalar_lea.vmem %s0, 11
    %v30 = vld [vmem:[%s29] sm:$0x1]
    %31 = vrot.lane.b32.xlu0 %v30, 88
    %v32 = vpop.permute.xlu0 %31
    %vm33 = vcmask 786112
    %34 = vst.msk [vmem:[#allocation0] sm:$0x1] %vm33, %v32
    %s35 = scalar_lea.vmem %s0, 10
    %v36 = vld [vmem:[%s35] sm:$0x1]
    %37 = vrot.lane.b32.xlu0 %v36, 80
    %v38 = vpop.permute.xlu0 %37
    %vm39 = vcmask 720512
    %40 = vst.msk [vmem:[#allocation0] sm:$0x1] %vm39, %v38
    %s41 = scalar_lea.vmem %s0, 9
    %v42 = vld [vmem:[%s41] sm:$0x1]
    %43 = vrot.lane.b32.xlu0 %v42, 72
    %v44 = vpop.permute.xlu0 %43
    %vm45 = vcmask 654912
    %46 = vst.msk [vmem:[#allocation0] sm:$0x1] %vm45, %v44
    %s47 = scalar_lea.vmem %s0, 8
    %v48 = vld [vmem:[%s47] sm:$0x1]
    %49 = vrot.lane.b32.xlu0 %v48, 64
    %v50 = vpop.permute.xlu0 %49
    %vm51 = vcmask 589312
    %52 = vst.msk [vmem:[#allocation0] sm:$0x1] %vm51, %v50
    %s53 = scalar_lea.vmem %s0, 7
    %v54 = vld [vmem:[%s53] sm:$0x1]
    %55 = vrot.lane.b32.xlu0 %v54, 56
    %v56 = vpop.permute.xlu0 %55
    %vm57 = vcmask 523712
    %58 = vst.msk [vmem:[#allocation0] sm:$0x1] %vm57, %v56
    %s59 = scalar_lea.vmem %s0, 6
    %v60 = vld [vmem:[%s59] sm:$0x1]
    %61 = vrot.lane.b32.xlu0 %v60, 48
    %v62 = vpop.permute.xlu0 %61
    %vm63 = vcmask 458112
    %64 = vst.msk [vmem:[#allocation0] sm:$0x1] %vm63, %v62
    %s65 = scalar_lea.vmem %s0, 5
    %v66 = vld [vmem:[%s65] sm:$0x1]
    %67 = vrot.lane.b32.xlu0 %v66, 40
    %v68 = vpop.permute.xlu0 %67
    %vm69 = vcmask 392512
    %70 = vst.msk [vmem:[#allocation0] sm:$0x1] %vm69, %v68
    %s71 = scalar_lea.vmem %s0, 4
    %v72 = vld [vmem:[%s71] sm:$0x1]
    %73 = vrot.lane.b32.xlu0 %v72, 32
    %v74 = vpop.permute.xlu0 %73
    %vm75 = vcmask 326912
    %76 = vst.msk [vmem:[#allocation0] sm:$0x1] %vm75, %v74
    %s77 = scalar_lea.vmem %s0, 3
    %v78 = vld [vmem:[%s77] sm:$0x1]
    %79 = vrot.lane.b32.xlu0 %v78, 24
    %v80 = vpop.permute.xlu0 %79
    %vm81 = vcmask 261312
    %82 = vst.msk [vmem:[#allocation0] sm:$0x1] %vm81, %v80
    %s83 = scalar_lea.vmem %s0, 2
    %v84 = vld [vmem:[%s83] sm:$0x1]
    %85 = vrot.lane.b32.xlu0 %v84, 16
    %v86 = vpop.permute.xlu0 %85
    %vm87 = vcmask 195712
    %88 = vst.msk [vmem:[#allocation0] sm:$0x1] %vm87, %v86
    %s89 = scalar_lea.vmem %s0, 1
    %v90 = vld [vmem:[%s89] sm:$0x1]
    %91 = vrot.lane.b32.xlu0 %v90, 8
    %v92 = vpop.permute.xlu0 %91
    %vm93 = vcmask 130112
    %94 = vst.msk [vmem:[#allocation0] sm:$0x1] %vm93, %v92
    %s96 = sshllo.u32 0, 1
    %v98 = vld [vmem:[#allocation0] sm:%s96]
    %s99 = sshllo.u32 0, 1
    %100 = vst [vmem:[%s1] sm:%s99] %v98

// kernel: basic_block_forward.1
$region0: #{basic_block_forward.1}
  #allocation0 [shape = 'u32[]', space=smem, size = 0x4, offset = 0x4, fixed_abs, tag = 'smem constant byte address 0x4 - core index']
  #allocation1 [shape = 'u32[144,128]{1,0:T(1,128)}', space=vmem, size = 0x12000, scoped, tag = 'internal scratch']
  #allocation2 [shape = 'f32[2,25,128]{2,1,0:T(8,128)}', space=vmem, size = 0x8000, scoped, tag = 'scratch operand']
  %s0 = inlined_call_operand.vmem [shape: f32[2,16,128], index: 0, kind: input, shape index: {}]
  %s1 = inlined_call_operand.vmem [shape: bf16[3,128,128], index: 1, kind: input, shape index: {}]
  %s2 = inlined_call_operand.vmem [shape: f32[1,128], index: 2, kind: input, shape index: {}]
  %s3 = inlined_call_operand.vmem [shape: f32[1,128], index: 3, kind: input, shape index: {}]
  %s4 = inlined_call_operand.vmem [shape: bf16[3,128,128], index: 4, kind: input, shape index: {}]
  %s5 = inlined_call_operand.vmem [shape: f32[1,128], index: 5, kind: input, shape index: {}]
  %s6 = inlined_call_operand.vmem [shape: f32[1,128], index: 6, kind: input, shape index: {}]
  %s7 = inlined_call_operand.vmem [shape: f32[2,16,128], index: 7, kind: output, shape index: {}]
  %s8 = sld [smem:[#allocation0]]
  $region38: #{basic_block_forward.1} parent=0
    _
  %s10 = ssub.s32 1, %s8
  %s11 = scalar_select 0, %s10, %s8
  // Predicated region
  $region2: #{basic_block_forward.1} parent=0 // pred_check
    _
  $region3: #{basic_block_forward.1} parent=0 // pred_check_branch
    %13 = sbr.rel (0) target = $region5
  $region4: #{basic_block_forward.1} parent=0 // pred_region
    _
  $region5: #{basic_block_forward.1} parent=0 // pred_fallthru
    _
  // Predicated region
  $region6: #{basic_block_forward.1} parent=0 // pred_check
    _
  $region7: #{basic_block_forward.1} parent=0 // pred_check_branch
    %15 = sbr.rel (0) target = $region9
  $region8: #{basic_block_forward.1} parent=0 // pred_region
    _
  $region9: #{basic_block_forward.1} parent=0 // pred_fallthru
    _
  // Predicated region
  $region10: #{basic_block_forward.1} parent=0 // pred_check
    _
  $region11: #{basic_block_forward.1} parent=0 // pred_check_branch
    %17 = sbr.rel (0) target = $region13
  $region12: #{basic_block_forward.1} parent=0 // pred_region
    _
  $region13: #{basic_block_forward.1} parent=0 // pred_fallthru
    _
  // Predicated region
  $region14: #{basic_block_forward.1} parent=0 // pred_check
    _
  $region15: #{basic_block_forward.1} parent=0 // pred_check_branch
    %19 = sbr.rel (0) target = $region17
  $region16: #{basic_block_forward.1} parent=0 // pred_region
    _
  $region17: #{basic_block_forward.1} parent=0 // pred_fallthru
    _
  // Predicated region
  $region18: #{basic_block_forward.1} parent=0 // pred_check
    _
  $region19: #{basic_block_forward.1} parent=0 // pred_check_branch
    %21 = sbr.rel (0) target = $region21
  $region20: #{basic_block_forward.1} parent=0 // pred_region
    _
  $region21: #{basic_block_forward.1} parent=0 // pred_fallthru
    _
  // Predicated region
  $region22: #{basic_block_forward.1} parent=0 // pred_check
    _
  $region23: #{basic_block_forward.1} parent=0 // pred_check_branch
    %23 = sbr.rel (0) target = $region25
  $region24: #{basic_block_forward.1} parent=0 // pred_region
    _
  $region25: #{basic_block_forward.1} parent=0 // pred_fallthru
    _
  // Predicated region
  $region26: #{basic_block_forward.1} parent=0 // pred_check
    _
  $region27: #{basic_block_forward.1} parent=0 // pred_check_branch
    %25 = sbr.rel (0) target = $region29
  $region28: #{basic_block_forward.1} parent=0 // pred_region
    _
  $region29: #{basic_block_forward.1} parent=0 // pred_fallthru
    _
  %27 = vst [vmem:[#allocation2 + $0x7] sm:$0x1] 0.0
  %28 = vst [vmem:[#allocation2 + $0x27] sm:$0x1] 0.0
  %29 = vst [vmem:[#allocation2 + $0x18] sm:$0x1] 0.0
  %30 = vst [vmem:[#allocation2 + $0x38] sm:$0x1] 0.0
  %v31 = vld [vmem:[%s0] sm:$0xff]
  %v32 = vld [vmem:[%s0 + $0x8] sm:$0xff]
  %v33 = vld [vmem:[%s0 + $0x10] sm:$0xff]
  %v34 = vld [vmem:[%s0 + $0x18] sm:$0xff]
  %35 = vst [vmem:[#allocation2 + $0x8] sm:$0xff] %v31
  %36 = vst [vmem:[#allocation2 + $0x10] sm:$0xff] %v32
  %37 = vst [vmem:[#allocation2 + $0x28] sm:$0xff] %v33
  %38 = vst [vmem:[#allocation2 + $0x30] sm:$0xff] %v34
  %v39 = vpack.c.bf16 %v32, %v31
  %v40 = vpack.c.bf16 %v34, %v33
  %s41 = scalar_lea.vmem %s1, 64
  %v42 = vld [vmem:[%s41] sm:$0xf]
  %v43 = vld [vmem:[%s41 + $0x4] sm:$0xf]
  %v44 = vld [vmem:[%s41 + $0x8] sm:$0xf]
  %v45 = vld [vmem:[%s41 + $0xc] sm:$0xf]
  %v46 = vld [vmem:[%s41 + $0x10] sm:$0xf]
  %v47 = vld [vmem:[%s41 + $0x14] sm:$0xf]
  %v48 = vld [vmem:[%s41 + $0x18] sm:$0xf]
  %v49 = vld [vmem:[%s41 + $0x1c] sm:$0xf]
  %v50 = vld [vmem:[%s41 + $0x20] sm:$0xf]
  %v51 = vld [vmem:[%s41 + $0x24] sm:$0xf]
  %v52 = vld [vmem:[%s41 + $0x28] sm:$0xf]
  %v53 = vld [vmem:[%s41 + $0x2c] sm:$0xf]
  %v54 = vld [vmem:[%s41 + $0x30] sm:$0xf]
  %v55 = vld [vmem:[%s41 + $0x34] sm:$0xf]
  %v56 = vld [vmem:[%s41 + $0x38] sm:$0xf]
  %v57 = vld [vmem:[%s41 + $0x3c] sm:$0xf]
  %v58 = vld [vmem:[#allocation2 + $0x7] sm:$0xff]
  %v59 = vld [vmem:[#allocation2 + $0xf] sm:$0xff]
  %v60 = vld [vmem:[#allocation2 + $0x27] sm:$0xff]
  %v61 = vld [vmem:[#allocation2 + $0x2f] sm:$0xff]
  %v62 = vpack.c.bf16 %v59, %v58
  %v63 = vpack.c.bf16 %v61, %v60
  %v64 = vld [vmem:[%s1] sm:$0xf]
  %v65 = vld [vmem:[%s1 + $0x4] sm:$0xf]
  %v66 = vld [vmem:[%s1 + $0x8] sm:$0xf]
  %v67 = vld [vmem:[%s1 + $0xc] sm:$0xf]
  %v68 = vld [vmem:[%s1 + $0x10] sm:$0xf]
  %v69 = vld [vmem:[%s1 + $0x14] sm:$0xf]
  %v70 = vld [vmem:[%s1 + $0x18] sm:$0xf]
  %v71 = vld [vmem:[%s1 + $0x1c] sm:$0xf]
  %v72 = vld [vmem:[%s1 + $0x20] sm:$0xf]
  %v73 = vld [vmem:[%s1 + $0x24] sm:$0xf]
  %v74 = vld [vmem:[%s1 + $0x28] sm:$0xf]
  %v75 = vld [vmem:[%s1 + $0x2c] sm:$0xf]
  %v76 = vld [vmem:[%s1 + $0x30] sm:$0xf]
  %v77 = vld [vmem:[%s1 + $0x34] sm:$0xf]
  %v78 = vld [vmem:[%s1 + $0x38] sm:$0xf]
  %v79 = vld [vmem:[%s1 + $0x3c] sm:$0xf]
  %v96 = vunpack.c.l.b16 %v64
  %v97 = vunpack.c.l.b16 %v65
  %v98 = vunpack.c.l.b16 %v66
  %v99 = vunpack.c.l.b16 %v67
  %v100 = vunpack.c.l.b16 %v68
  %v101 = vunpack.c.l.b16 %v69
  %v102 = vunpack.c.l.b16 %v70
  %v103 = vunpack.c.l.b16 %v71
  %v104 = vunpack.c.l.b16 %v72
  %v105 = vunpack.c.l.b16 %v73
  %v106 = vunpack.c.l.b16 %v74
  %v107 = vunpack.c.l.b16 %v75
  %v108 = vunpack.c.l.b16 %v76
  %v109 = vunpack.c.l.b16 %v77
  %v110 = vunpack.c.l.b16 %v78
  %v111 = vunpack.c.l.b16 %v79
  %v112 = vpack.c.b16 %v97, %v96
  %v113 = vpack.c.b16 %v99, %v98
  %v114 = vpack.c.b16 %v101, %v100
  %v115 = vpack.c.b16 %v103, %v102
  %v116 = vpack.c.b16 %v105, %v104
  %v117 = vpack.c.b16 %v107, %v106
  %v118 = vpack.c.b16 %v109, %v108
  %v119 = vpack.c.b16 %v111, %v110
  %128 = vmatprep.subr.bf16.mxu0 0
  %129 = vmatpush1.bf16.msra.mxu0 %v112
  %130 = vmatprep.subr.bf16.mxu0 0
  %131 = vmatpush1.bf16.msra.mxu0 %v113
  %132 = vmatprep.subr.bf16.mxu0 0
  %133 = vmatpush1.bf16.msra.mxu0 %v114
  %134 = vmatprep.subr.bf16.mxu0 0
  %135 = vmatpush1.bf16.msra.mxu0 %v115
  %136 = vmatprep.subr.bf16.mxu0 0
  %137 = vmatpush1.bf16.msra.mxu0 %v116
  %138 = vmatprep.subr.bf16.mxu0 0
  %139 = vmatpush1.bf16.msra.mxu0 %v117
  %140 = vmatprep.subr.bf16.mxu0 0
  %141 = vmatpush1.bf16.msra.mxu0 %v118
  %142 = vmatprep.subr.bf16.mxu0 0
  %143 = vmatpush1.bf16.msra.mxu0 %v119
  %144 = vmatprep.subr.bf16.mxu0 0
  %145 = vmatpush1.bf16.msra.mxu0 0
  %146 = vmatprep.subr.bf16.mxu0 0
  %147 = vmatpush1.bf16.msra.mxu0 0
  %148 = vmatprep.subr.bf16.mxu0 0
  %149 = vmatpush1.bf16.msra.mxu0 0
  %150 = vmatprep.subr.bf16.mxu0 0
  %151 = vmatpush1.bf16.msra.mxu0 0
  %152 = vmatprep.subr.bf16.mxu0 0
  %153 = vmatpush1.bf16.msra.mxu0 0
  %154 = vmatprep.subr.bf16.mxu0 0
  %155 = vmatpush1.bf16.msra.mxu0 0
  %156 = vmatprep.subr.bf16.mxu0 0
  %157 = vmatpush1.bf16.msra.mxu0 0
  %158 = vmatprep.subr.bf16.mxu0 0
  %159 = vmatpush1.bf16.msra.mxu0 0
  %160 = vmatprep.mubr.bf16.mxu0 0
  %161 = vmatmul.mubr.bf16.gmra.mrb[0].mxu0 %v62
  %v162 = vpop.f32.mrb[0].mxu0
  %v163 = vadd.f32 0.0, %v162
  %v164 = vpop.f32.mrb[0].mxu0
  %v165 = vpop.f32.mrb[0].mxu0
  %v166 = vadd.f32 0.0, %v165
  %v167 = vpop.f32.mrb[0].mxu0
  %168 = vmatprep.mubr.bf16.mxu0 0
  %169 = vmatmul.mubr.bf16.gmra.mrb[0].mxu0 %v63
  %v170 = vpop.f32.mrb[0].mxu0
  %v171 = vadd.f32 0.0, %v170
  %v172 = vpop.f32.mrb[0].mxu0
  %v173 = vpop.f32.mrb[0].mxu0
  %v174 = vadd.f32 0.0, %v173
  %v175 = vpop.f32.mrb[0].mxu0
  %176 = vdwg.mxu0
  %v193 = vunpack.c.l.b16 %v42
  %v194 = vunpack.c.l.b16 %v43
  %v195 = vunpack.c.l.b16 %v44
  %v196 = vunpack.c.l.b16 %v45
  %v197 = vunpack.c.l.b16 %v46
  %v198 = vunpack.c.l.b16 %v47
  %v199 = vunpack.c.l.b16 %v48
  %v200 = vunpack.c.l.b16 %v49
  %v201 = vunpack.c.l.b16 %v50
  %v202 = vunpack.c.l.b16 %v51
  %v203 = vunpack.c.l.b16 %v52
  %v204 = vunpack.c.l.b16 %v53
  %v205 = vunpack.c.l.b16 %v54
  %v206 = vunpack.c.l.b16 %v55
  %v207 = vunpack.c.l.b16 %v56
  %v208 = vunpack.c.l.b16 %v57
  %v209 = vpack.c.b16 %v194, %v193
  %v210 = vpack.c.b16 %v196, %v195
  %v211 = vpack.c.b16 %v198, %v197
  %v212 = vpack.c.b16 %v200, %v199
  %v213 = vpack.c.b16 %v202, %v201
  %v214 = vpack.c.b16 %v204, %v203
  %v215 = vpack.c.b16 %v206, %v205
  %v216 = vpack.c.b16 %v208, %v207
  %225 = vmatprep.subr.bf16.mxu0 0
  %226 = vmatpush1.bf16.msra.mxu0 %v209
  %227 = vmatprep.subr.bf16.mxu0 0
  %228 = vmatpush1.bf16.msra.mxu0 %v210
  %229 = vmatprep.subr.bf16.mxu0 0
  %230 = vmatpush1.bf16.msra.mxu0 %v211
  %231 = vmatprep.subr.bf16.mxu0 0
  %232 = vmatpush1.bf16.msra.mxu0 %v212
  %233 = vmatprep.subr.bf16.mxu0 0
  %234 = vmatpush1.bf16.msra.mxu0 %v213
  %235 = vmatprep.subr.bf16.mxu0 0
  %236 = vmatpush1.bf16.msra.mxu0 %v214
  %237 = vmatprep.subr.bf16.mxu0 0
  %238 = vmatpush1.bf16.msra.mxu0 %v215
  %239 = vmatprep.subr.bf16.mxu0 0
  %240 = vmatpush1.bf16.msra.mxu0 %v216
  %241 = vmatprep.subr.bf16.mxu0 0
  %242 = vmatpush1.bf16.msra.mxu0 0
  %243 = vmatprep.subr.bf16.mxu0 0
  %244 = vmatpush1.bf16.msra.mxu0 0
  %245 = vmatprep.subr.bf16.mxu0 0
  %246 = vmatpush1.bf16.msra.mxu0 0
  %247 = vmatprep.subr.bf16.mxu0 0
  %248 = vmatpush1.bf16.msra.mxu0 0
  %249 = vmatprep.subr.bf16.mxu0 0
  %250 = vmatpush1.bf16.msra.mxu0 0
  %251 = vmatprep.subr.bf16.mxu0 0
  %252 = vmatpush1.bf16.msra.mxu0 0
  %253 = vmatprep.subr.bf16.mxu0 0
  %254 = vmatpush1.bf16.msra.mxu0 0
  %255 = vmatprep.subr.bf16.mxu0 0
  %256 = vmatpush1.bf16.msra.mxu0 0
  %257 = vmatprep.mubr.bf16.mxu0 0
  %258 = vmatmul.mubr.bf16.gmra.mrb[0].mxu0 %v39
  %v259 = vpop.f32.mrb[0].mxu0
  %v260 = vadd.f32 %v163, %v259
  %v261 = vpop.f32.mrb[0].mxu0
  %v262 = vpop.f32.mrb[0].mxu0
  %v263 = vadd.f32 %v166, %v262
  %v264 = vpop.f32.mrb[0].mxu0
  %265 = vmatprep.mubr.bf16.mxu0 0
  %266 = vmatmul.mubr.bf16.gmra.mrb[0].mxu0 %v40
  %v267 = vpop.f32.mrb[0].mxu0
  %v268 = vadd.f32 %v171, %v267
  %v269 = vpop.f32.mrb[0].mxu0
  %v270 = vpop.f32.mrb[0].mxu0
  %v271 = vadd.f32 %v174, %v270
  %v272 = vpop.f32.mrb[0].mxu0
  %273 = vdwg.mxu0
  %v274 = vld [vmem:[#allocation2 + $0x9] sm:$0xff]
  %v275 = vld [vmem:[#allocation2 + $0x11] sm:$0xff]
  %v276 = vld [vmem:[#allocation2 + $0x29] sm:$0xff]
  %v277 = vld [vmem:[#allocation2 + $0x31] sm:$0xff]
  %v278 = vpack.c.bf16 %v275, %v274
  %v279 = vpack.c.bf16 %v277, %v276
  %s280 = scalar_lea.vmem %s1, 128
  %v281 = vld [vmem:[%s280] sm:$0xf]
  %v282 = vld [vmem:[%s280 + $0x4] sm:$0xf]
  %v283 = vld [vmem:[%s280 + $0x8] sm:$0xf]
  %v284 = vld [vmem:[%s280 + $0xc] sm:$0xf]
  %v285 = vld [vmem:[%s280 + $0x10] sm:$0xf]
  %v286 = vld [vmem:[%s280 + $0x14] sm:$0xf]
  %v287 = vld [vmem:[%s280 + $0x18] sm:$0xf]
  %v288 = vld [vmem:[%s280 + $0x1c] sm:$0xf]
  %v289 = vld [vmem:[%s280 + $0x20] sm:$0xf]
  %v290 = vld [vmem:[%s280 + $0x24] sm:$0xf]
  %v291 = vld [vmem:[%s280 + $0x28] sm:$0xf]
  %v292 = vld [vmem:[%s280 + $0x2c] sm:$0xf]
  %v293 = vld [vmem:[%s280 + $0x30] sm:$0xf]
  %v294 = vld [vmem:[%s280 + $0x34] sm:$0xf]
  %v295 = vld [vmem:[%s280 + $0x38] sm:$0xf]
  %v296 = vld [vmem:[%s280 + $0x3c] sm:$0xf]
  %v313 = vunpack.c.l.b16 %v281
  %v314 = vunpack.c.l.b16 %v282
  %v315 = vunpack.c.l.b16 %v283
  %v316 = vunpack.c.l.b16 %v284
  %v317 = vunpack.c.l.b16 %v285
  %v318 = vunpack.c.l.b16 %v286
  %v319 = vunpack.c.l.b16 %v287
  %v320 = vunpack.c.l.b16 %v288
  %v321 = vunpack.c.l.b16 %v289
  %v322 = vunpack.c.l.b16 %v290
  %v323 = vunpack.c.l.b16 %v291
  %v324 = vunpack.c.l.b16 %v292
  %v325 = vunpack.c.l.b16 %v293
  %v326 = vunpack.c.l.b16 %v294
  %v327 = vunpack.c.l.b16 %v295
  %v328 = vunpack.c.l.b16 %v296
  %v329 = vpack.c.b16 %v314, %v313
  %v330 = vpack.c.b16 %v316, %v315
  %v331 = vpack.c.b16 %v318, %v317
  %v332 = vpack.c.b16 %v320, %v319
  %v333 = vpack.c.b16 %v322, %v321
  %v334 = vpack.c.b16 %v324, %v323
  %v335 = vpack.c.b16 %v326, %v325
  %v336 = vpack.c.b16 %v328, %v327
  %345 = vmatprep.subr.bf16.mxu0 0
  %346 = vmatpush1.bf16.msra.mxu0 %v329
  %347 = vmatprep.subr.bf16.mxu0 0
  %348 = vmatpush1.bf16.msra.mxu0 %v330
  %349 = vmatprep.subr.bf16.mxu0 0
  %350 = vmatpush1.bf16.msra.mxu0 %v331
  %351 = vmatprep.subr.bf16.mxu0 0
  %352 = vmatpush1.bf16.msra.mxu0 %v332
  %353 = vmatprep.subr.bf16.mxu0 0
  %354 = vmatpush1.bf16.msra.mxu0 %v333
  %355 = vmatprep.subr.bf16.mxu0 0
  %356 = vmatpush1.bf16.msra.mxu0 %v334
  %357 = vmatprep.subr.bf16.mxu0 0
  %358 = vmatpush1.bf16.msra.mxu0 %v335
  %359 = vmatprep.subr.bf16.mxu0 0
  %360 = vmatpush1.bf16.msra.mxu0 %v336
  %361 = vmatprep.subr.bf16.mxu0 0
  %362 = vmatpush1.bf16.msra.mxu0 0
  %363 = vmatprep.subr.bf16.mxu0 0
  %364 = vmatpush1.bf16.msra.mxu0 0
  %365 = vmatprep.subr.bf16.mxu0 0
  %366 = vmatpush1.bf16.msra.mxu0 0
  %367 = vmatprep.subr.bf16.mxu0 0
  %368 = vmatpush1.bf16.msra.mxu0 0
  %369 = vmatprep.subr.bf16.mxu0 0
  %370 = vmatpush1.bf16.msra.mxu0 0
  %371 = vmatprep.subr.bf16.mxu0 0
  %372 = vmatpush1.bf16.msra.mxu0 0
  %373 = vmatprep.subr.bf16.mxu0 0
  %374 = vmatpush1.bf16.msra.mxu0 0
  %375 = vmatprep.subr.bf16.mxu0 0
  %376 = vmatpush1.bf16.msra.mxu0 0
  %377 = vmatprep.mubr.bf16.mxu0 0
  %378 = vmatmul.mubr.bf16.gmra.mrb[0].mxu0 %v278
  %v379 = vpop.f32.mrb[0].mxu0
  %v380 = vadd.f32 0.0, %v379
  %v381 = vpop.f32.mrb[0].mxu0
  %v382 = vpop.f32.mrb[0].mxu0
  %v383 = vadd.f32 0.0, %v382
  %v384 = vpop.f32.mrb[0].mxu0
  %385 = vmatprep.mubr.bf16.mxu0 0
  %386 = vmatmul.mubr.bf16.gmra.mrb[0].mxu0 %v279
  %v387 = vpop.f32.mrb[0].mxu0
  %v388 = vadd.f32 0.0, %v387
  %v389 = vpop.f32.mrb[0].mxu0
  %v390 = vpop.f32.mrb[0].mxu0
  %v391 = vadd.f32 0.0, %v390
  %v392 = vpop.f32.mrb[0].mxu0
  %393 = vdwg.mxu0
  %v394 = vadd.f32 %v260, %v380
  %v395 = vadd.f32 %v263, %v383
  %v396 = vadd.f32 %v268, %v388
  %v397 = vadd.f32 %v271, %v391
  %v398 = vld [vmem:[%s2] sm:$0x1]
  %v400 = vlaneseq
  %v401 = vshrl.u32 %v400, 7
  %v402 = vsub.s32 0, %v401
  %v403 = vrot.slane %v398, %v402
  %v405 = vmul.f32 %v394, %v403
  %v406 = vmul.f32 %v395, %v403
  %v407 = vmul.f32 %v396, %v403
  %v408 = vmul.f32 %v397, %v403
  %v409 = vld [vmem:[%s3] sm:$0x1]
  %v411 = vlaneseq
  %v412 = vshrl.u32 %v411, 7
  %v413 = vsub.s32 0, %v412
  %v414 = vrot.slane %v409, %v413
  %v416 = vadd.f32 %v405, %v414
  %v417 = vadd.f32 %v406, %v414
  %v418 = vadd.f32 %v407, %v414
  %v419 = vadd.f32 %v408, %v414
  %v420 = vmax.f32 %v416, 0.0
  %v421 = vmax.f32 %v417, 0.0
  %v422 = vmax.f32 %v418, 0.0
  %v423 = vmax.f32 %v419, 0.0
  %424 = vst [vmem:[#allocation2 + $0x8] sm:$0xff] %v420
  %425 = vst [vmem:[#allocation2 + $0x10] sm:$0xff] %v421
  %426 = vst [vmem:[#allocation2 + $0x28] sm:$0xff] %v422
  %427 = vst [vmem:[#allocation2 + $0x30] sm:$0xff] %v423
  %v428 = vpack.c.bf16 %v421, %v420
  %v429 = vpack.c.bf16 %v423, %v422
  %s430 = scalar_lea.vmem %s4, 64
  %v431 = vld [vmem:[%s430] sm:$0xf]
  %v432 = vld [vmem:[%s430 + $0x4] sm:$0xf]
  %v433 = vld [vmem:[%s430 + $0x8] sm:$0xf]
  %v434 = vld [vmem:[%s430 + $0xc] sm:$0xf]
  %v435 = vld [vmem:[%s430 + $0x10] sm:$0xf]
  %v436 = vld [vmem:[%s430 + $0x14] sm:$0xf]
  %v437 = vld [vmem:[%s430 + $0x18] sm:$0xf]
  %v438 = vld [vmem:[%s430 + $0x1c] sm:$0xf]
  %v439 = vld [vmem:[%s430 + $0x20] sm:$0xf]
  %v440 = vld [vmem:[%s430 + $0x24] sm:$0xf]
  %v441 = vld [vmem:[%s430 + $0x28] sm:$0xf]
  %v442 = vld [vmem:[%s430 + $0x2c] sm:$0xf]
  %v443 = vld [vmem:[%s430 + $0x30] sm:$0xf]
  %v444 = vld [vmem:[%s430 + $0x34] sm:$0xf]
  %v445 = vld [vmem:[%s430 + $0x38] sm:$0xf]
  %v446 = vld [vmem:[%s430 + $0x3c] sm:$0xf]
  %v447 = vld [vmem:[#allocation2 + $0x7] sm:$0xff]
  %v448 = vld [vmem:[#allocation2 + $0xf] sm:$0xff]
  %v449 = vld [vmem:[#allocation2 + $0x27] sm:$0xff]
  %v450 = vld [vmem:[#allocation2 + $0x2f] sm:$0xff]
  %v451 = vpack.c.bf16 %v448, %v447
  %v452 = vpack.c.bf16 %v450, %v449
  %v453 = vld [vmem:[%s4] sm:$0xf]
  %v454 = vld [vmem:[%s4 + $0x4] sm:$0xf]
  %v455 = vld [vmem:[%s4 + $0x8] sm:$0xf]
  %v456 = vld [vmem:[%s4 + $0xc] sm:$0xf]
  %v457 = vld [vmem:[%s4 + $0x10] sm:$0xf]
  %v458 = vld [vmem:[%s4 + $0x14] sm:$0xf]
  %v459 = vld [vmem:[%s4 + $0x18] sm:$0xf]
  %v460 = vld [vmem:[%s4 + $0x1c] sm:$0xf]
  %v461 = vld [vmem:[%s4 + $0x20] sm:$0xf]
  %v462 = vld [vmem:[%s4 + $0x24] sm:$0xf]
  %v463 = vld [vmem:[%s4 + $0x28] sm:$0xf]
  %v464 = vld [vmem:[%s4 + $0x2c] sm:$0xf]
  %v465 = vld [vmem:[%s4 + $0x30] sm:$0xf]
  %v466 = vld [vmem:[%s4 + $0x34] sm:$0xf]
  %v467 = vld [vmem:[%s4 + $0x38] sm:$0xf]
  %v468 = vld [vmem:[%s4 + $0x3c] sm:$0xf]
  %v485 = vunpack.c.l.b16 %v453
  %v486 = vunpack.c.l.b16 %v454
  %v487 = vunpack.c.l.b16 %v455
  %v488 = vunpack.c.l.b16 %v456
  %v489 = vunpack.c.l.b16 %v457
  %v490 = vunpack.c.l.b16 %v458
  %v491 = vunpack.c.l.b16 %v459
  %v492 = vunpack.c.l.b16 %v460
  %v493 = vunpack.c.l.b16 %v461
  %v494 = vunpack.c.l.b16 %v462
  %v495 = vunpack.c.l.b16 %v463
  %v496 = vunpack.c.l.b16 %v464
  %v497 = vunpack.c.l.b16 %v465
  %v498 = vunpack.c.l.b16 %v466
  %v499 = vunpack.c.l.b16 %v467
  %v500 = vunpack.c.l.b16 %v468
  %v501 = vpack.c.b16 %v486, %v485
  %v502 = vpack.c.b16 %v488, %v487
  %v503 = vpack.c.b16 %v490, %v489
  %v504 = vpack.c.b16 %v492, %v491
  %v505 = vpack.c.b16 %v494, %v493
  %v506 = vpack.c.b16 %v496, %v495
  %v507 = vpack.c.b16 %v498, %v497
  %v508 = vpack.c.b16 %v500, %v499
  %517 = vmatprep.subr.bf16.mxu0 0
  %518 = vmatpush1.bf16.msra.mxu0 %v501
  %519 = vmatprep.subr.bf16.mxu0 0
  %520 = vmatpush1.bf16.msra.mxu0 %v502
  %521 = vmatprep.subr.bf16.mxu0 0
  %522 = vmatpush1.bf16.msra.mxu0 %v503
  %523 = vmatprep.subr.bf16.mxu0 0
  %524 = vmatpush1.bf16.msra.mxu0 %v504
  %525 = vmatprep.subr.bf16.mxu0 0
  %526 = vmatpush1.bf16.msra.mxu0 %v505
  %527 = vmatprep.subr.bf16.mxu0 0
  %528 = vmatpush1.bf16.msra.mxu0 %v506
  %529 = vmatprep.subr.bf16.mxu0 0
  %530 = vmatpush1.bf16.msra.mxu0 %v507
  %531 = vmatprep.subr.bf16.mxu0 0
  %532 = vmatpush1.bf16.msra.mxu0 %v508
  %533 = vmatprep.subr.bf16.mxu0 0
  %534 = vmatpush1.bf16.msra.mxu0 0
  %535 = vmatprep.subr.bf16.mxu0 0
  %536 = vmatpush1.bf16.msra.mxu0 0
  %537 = vmatprep.subr.bf16.mxu0 0
  %538 = vmatpush1.bf16.msra.mxu0 0
  %539 = vmatprep.subr.bf16.mxu0 0
  %540 = vmatpush1.bf16.msra.mxu0 0
  %541 = vmatprep.subr.bf16.mxu0 0
  %542 = vmatpush1.bf16.msra.mxu0 0
  %543 = vmatprep.subr.bf16.mxu0 0
  %544 = vmatpush1.bf16.msra.mxu0 0
  %545 = vmatprep.subr.bf16.mxu0 0
  %546 = vmatpush1.bf16.msra.mxu0 0
  %547 = vmatprep.subr.bf16.mxu0 0
  %548 = vmatpush1.bf16.msra.mxu0 0
  %549 = vmatprep.mubr.bf16.mxu0 0
  %550 = vmatmul.mubr.bf16.gmra.mrb[0].mxu0 %v451
  %v551 = vpop.f32.mrb[0].mxu0
  %v552 = vadd.f32 0.0, %v551
  %v553 = vpop.f32.mrb[0].mxu0
  %v554 = vpop.f32.mrb[0].mxu0
  %v555 = vadd.f32 0.0, %v554
  %v556 = vpop.f32.mrb[0].mxu0
  %557 = vmatprep.mubr.bf16.mxu0 0
  %558 = vmatmul.mubr.bf16.gmra.mrb[0].mxu0 %v452
  %v559 = vpop.f32.mrb[0].mxu0
  %v560 = vadd.f32 0.0, %v559
  %v561 = vpop.f32.mrb[0].mxu0
  %v562 = vpop.f32.mrb[0].mxu0
  %v563 = vadd.f32 0.0, %v562
  %v564 = vpop.f32.mrb[0].mxu0
  %565 = vdwg.mxu0
  %v582 = vunpack.c.l.b16 %v431
  %v583 = vunpack.c.l.b16 %v432
  %v584 = vunpack.c.l.b16 %v433
  %v585 = vunpack.c.l.b16 %v434
  %v586 = vunpack.c.l.b16 %v435
  %v587 = vunpack.c.l.b16 %v436
  %v588 = vunpack.c.l.b16 %v437
  %v589 = vunpack.c.l.b16 %v438
  %v590 = vunpack.c.l.b16 %v439
  %v591 = vunpack.c.l.b16 %v440
  %v592 = vunpack.c.l.b16 %v441
  %v593 = vunpack.c.l.b16 %v442
  %v594 = vunpack.c.l.b16 %v443
  %v595 = vunpack.c.l.b16 %v444
  %v596 = vunpack.c.l.b16 %v445
  %v597 = vunpack.c.l.b16 %v446
  %v598 = vpack.c.b16 %v583, %v582
  %v599 = vpack.c.b16 %v585, %v584
  %v600 = vpack.c.b16 %v587, %v586
  %v601 = vpack.c.b16 %v589, %v588
  %v602 = vpack.c.b16 %v591, %v590
  %v603 = vpack.c.b16 %v593, %v592
  %v604 = vpack.c.b16 %v595, %v594
  %v605 = vpack.c.b16 %v597, %v596
  %614 = vmatprep.subr.bf16.mxu0 0
  %615 = vmatpush1.bf16.msra.mxu0 %v598
  %616 = vmatprep.subr.bf16.mxu0 0
  %617 = vmatpush1.bf16.msra.mxu0 %v599
  %618 = vmatprep.subr.bf16.mxu0 0
  %619 = vmatpush1.bf16.msra.mxu0 %v600
  %620 = vmatprep.subr.bf16.mxu0 0
  %621 = vmatpush1.bf16.msra.mxu0 %v601
  %622 = vmatprep.subr.bf16.mxu0 0
  %623 = vmatpush1.bf16.msra.mxu0 %v602
  %624 = vmatprep.subr.bf16.mxu0 0
  %625 = vmatpush1.bf16.msra.mxu0 %v603
  %626 = vmatprep.subr.bf16.mxu0 0
  %627 = vmatpush1.bf16.msra.mxu0 %v604
  %628 = vmatprep.subr.bf16.mxu0 0
  %629 = vmatpush1.bf16.msra.mxu0 %v605
  %630 = vmatprep.subr.bf16.mxu0 0
  %631 = vmatpush1.bf16.msra.mxu0 0
  %632 = vmatprep.subr.bf16.mxu0 0
  %633 = vmatpush1.bf16.msra.mxu0 0
  %634 = vmatprep.subr.bf16.mxu0 0
  %635 = vmatpush1.bf16.msra.mxu0 0
  %636 = vmatprep.subr.bf16.mxu0 0
  %637 = vmatpush1.bf16.msra.mxu0 0
  %638 = vmatprep.subr.bf16.mxu0 0
  %639 = vmatpush1.bf16.msra.mxu0 0
  %640 = vmatprep.subr.bf16.mxu0 0
  %641 = vmatpush1.bf16.msra.mxu0 0
  %642 = vmatprep.subr.bf16.mxu0 0
  %643 = vmatpush1.bf16.msra.mxu0 0
  %644 = vmatprep.subr.bf16.mxu0 0
  %645 = vmatpush1.bf16.msra.mxu0 0
  %646 = vmatprep.mubr.bf16.mxu0 0
  %647 = vmatmul.mubr.bf16.gmra.mrb[0].mxu0 %v428
  %v648 = vpop.f32.mrb[0].mxu0
  %v649 = vadd.f32 %v552, %v648
  %v650 = vpop.f32.mrb[0].mxu0
  %v651 = vpop.f32.mrb[0].mxu0
  %v652 = vadd.f32 %v555, %v651
  %v653 = vpop.f32.mrb[0].mxu0
  %654 = vmatprep.mubr.bf16.mxu0 0
  %655 = vmatmul.mubr.bf16.gmra.mrb[0].mxu0 %v429
  %v656 = vpop.f32.mrb[0].mxu0
  %v657 = vadd.f32 %v560, %v656
  %v658 = vpop.f32.mrb[0].mxu0
  %v659 = vpop.f32.mrb[0].mxu0
  %v660 = vadd.f32 %v563, %v659
  %v661 = vpop.f32.mrb[0].mxu0
  %662 = vdwg.mxu0
  %v663 = vld [vmem:[#allocation2 + $0x9] sm:$0xff]
  %v664 = vld [vmem:[#allocation2 + $0x11] sm:$0xff]
  %v665 = vld [vmem:[#allocation2 + $0x29] sm:$0xff]
  %v666 = vld [vmem:[#allocation2 + $0x31] sm:$0xff]
  %v667 = vpack.c.bf16 %v664, %v663
  %v668 = vpack.c.bf16 %v666, %v665
  %s669 = scalar_lea.vmem %s4, 128
  %v670 = vld [vmem:[%s669] sm:$0xf]
  %v671 = vld [vmem:[%s669 + $0x4] sm:$0xf]
  %v672 = vld [vmem:[%s669 + $0x8] sm:$0xf]
  %v673 = vld [vmem:[%s669 + $0xc] sm:$0xf]
  %v674 = vld [vmem:[%s669 + $0x10] sm:$0xf]
  %v675 = vld [vmem:[%s669 + $0x14] sm:$0xf]
  %v676 = vld [vmem:[%s669 + $0x18] sm:$0xf]
  %v677 = vld [vmem:[%s669 + $0x1c] sm:$0xf]
  %v678 = vld [vmem:[%s669 + $0x20] sm:$0xf]
  %v679 = vld [vmem:[%s669 + $0x24] sm:$0xf]
  %v680 = vld [vmem:[%s669 + $0x28] sm:$0xf]
  %v681 = vld [vmem:[%s669 + $0x2c] sm:$0xf]
  %v682 = vld [vmem:[%s669 + $0x30] sm:$0xf]
  %v683 = vld [vmem:[%s669 + $0x34] sm:$0xf]
  %v684 = vld [vmem:[%s669 + $0x38] sm:$0xf]
  %v685 = vld [vmem:[%s669 + $0x3c] sm:$0xf]
  %v702 = vunpack.c.l.b16 %v670
  %v703 = vunpack.c.l.b16 %v671
  %v704 = vunpack.c.l.b16 %v672
  %v705 = vunpack.c.l.b16 %v673
  %v706 = vunpack.c.l.b16 %v674
  %v707 = vunpack.c.l.b16 %v675
  %v708 = vunpack.c.l.b16 %v676
  %v709 = vunpack.c.l.b16 %v677
  %v710 = vunpack.c.l.b16 %v678
  %v711 = vunpack.c.l.b16 %v679
  %v712 = vunpack.c.l.b16 %v680
  %v713 = vunpack.c.l.b16 %v681
  %v714 = vunpack.c.l.b16 %v682
  %v715 = vunpack.c.l.b16 %v683
  %v716 = vunpack.c.l.b16 %v684
  %v717 = vunpack.c.l.b16 %v685
  %v718 = vpack.c.b16 %v703, %v702
  %v719 = vpack.c.b16 %v705, %v704
  %v720 = vpack.c.b16 %v707, %v706
  %v721 = vpack.c.b16 %v709, %v708
  %v722 = vpack.c.b16 %v711, %v710
  %v723 = vpack.c.b16 %v713, %v712
  %v724 = vpack.c.b16 %v715, %v714
  %v725 = vpack.c.b16 %v717, %v716
  %734 = vmatprep.subr.bf16.mxu0 0
  %735 = vmatpush1.bf16.msra.mxu0 %v718
  %736 = vmatprep.subr.bf16.mxu0 0
  %737 = vmatpush1.bf16.msra.mxu0 %v719
  %738 = vmatprep.subr.bf16.mxu0 0
  %739 = vmatpush1.bf16.msra.mxu0 %v720
  %740 = vmatprep.subr.bf16.mxu0 0
  %741 = vmatpush1.bf16.msra.mxu0 %v721
  %742 = vmatprep.subr.bf16.mxu0 0
  %743 = vmatpush1.bf16.msra.mxu0 %v722
  %744 = vmatprep.subr.bf16.mxu0 0
  %745 = vmatpush1.bf16.msra.mxu0 %v723
  %746 = vmatprep.subr.bf16.mxu0 0
  %747 = vmatpush1.bf16.msra.mxu0 %v724
  %748 = vmatprep.subr.bf16.mxu0 0
  %749 = vmatpush1.bf16.msra.mxu0 %v725
  %750 = vmatprep.subr.bf16.mxu0 0
  %751 = vmatpush1.bf16.msra.mxu0 0
  %752 = vmatprep.subr.bf16.mxu0 0
  %753 = vmatpush1.bf16.msra.mxu0 0
  %754 = vmatprep.subr.bf16.mxu0 0
  %755 = vmatpush1.bf16.msra.mxu0 0
  %756 = vmatprep.subr.bf16.mxu0 0
  %757 = vmatpush1.bf16.msra.mxu0 0
  %758 = vmatprep.subr.bf16.mxu0 0
  %759 = vmatpush1.bf16.msra.mxu0 0
  %760 = vmatprep.subr.bf16.mxu0 0
  %761 = vmatpush1.bf16.msra.mxu0 0
  %762 = vmatprep.subr.bf16.mxu0 0
  %763 = vmatpush1.bf16.msra.mxu0 0
  %764 = vmatprep.subr.bf16.mxu0 0
  %765 = vmatpush1.bf16.msra.mxu0 0
  %766 = vmatprep.mubr.bf16.mxu0 0
  %767 = vmatmul.mubr.bf16.gmra.mrb[0].mxu0 %v667
  %v768 = vpop.f32.mrb[0].mxu0
  %v769 = vadd.f32 0.0, %v768
  %v770 = vpop.f32.mrb[0].mxu0
  %v771 = vpop.f32.mrb[0].mxu0
  %v772 = vadd.f32 0.0, %v771
  %v773 = vpop.f32.mrb[0].mxu0
  %774 = vmatprep.mubr.bf16.mxu0 0
  %775 = vmatmul.mubr.bf16.gmra.mrb[0].mxu0 %v668
  %v776 = vpop.f32.mrb[0].mxu0
  %v777 = vadd.f32 0.0, %v776
  %v778 = vpop.f32.mrb[0].mxu0
  %v779 = vpop.f32.mrb[0].mxu0
  %v780 = vadd.f32 0.0, %v779
  %v781 = vpop.f32.mrb[0].mxu0
  %782 = vdwg.mxu0
  %v783 = vadd.f32 %v649, %v769
  %v784 = vadd.f32 %v652, %v772
  %v785 = vadd.f32 %v657, %v777
  %v786 = vadd.f32 %v660, %v780
  %v787 = vld [vmem:[%s5] sm:$0x1]
  %v789 = vlaneseq
  %v790 = vshrl.u32 %v789, 7
  %v791 = vsub.s32 0, %v790
  %v792 = vrot.slane %v787, %v791
  %v794 = vmul.f32 %v783, %v792
  %v795 = vmul.f32 %v784, %v792
  %v796 = vmul.f32 %v785, %v792
  %v797 = vmul.f32 %v786, %v792
  %v798 = vld [vmem:[%s6] sm:$0x1]
  %v800 = vlaneseq
  %v801 = vshrl.u32 %v800, 7
  %v802 = vsub.s32 0, %v801
  %v803 = vrot.slane %v798, %v802
  %v805 = vadd.f32 %v794, %v803
  %v806 = vadd.f32 %v795, %v803
  %v807 = vadd.f32 %v796, %v803
  %v808 = vadd.f32 %v797, %v803
  %v809 = vld [vmem:[%s0] sm:$0xff]
  %v810 = vld [vmem:[%s0 + $0x8] sm:$0xff]
  %v811 = vld [vmem:[%s0 + $0x10] sm:$0xff]
  %v812 = vld [vmem:[%s0 + $0x18] sm:$0xff]
  %v813 = vadd.f32 %v805, %v809
  %v814 = vadd.f32 %v806, %v810
  %v815 = vadd.f32 %v807, %v811
  %v816 = vadd.f32 %v808, %v812
  %v817 = vmax.f32 %v813, 0.0
  %v818 = vmax.f32 %v814, 0.0
  %v819 = vmax.f32 %v815, 0.0
  %v820 = vmax.f32 %v816, 0.0
  %821 = vst [vmem:[%s7] sm:$0xff] %v817
  %822 = vst [vmem:[%s7 + $0x8] sm:$0xff] %v818
  %823 = vst [vmem:[%s7 + $0x10] sm:$0xff] %v819
  %824 = vst [vmem:[%s7 + $0x18] sm:$0xff] %v820
  // Predicated region
  $region30: #{basic_block_forward.1} parent=0 // pred_check
    _
  $region31: #{basic_block_forward.1} parent=0 // pred_check_branch
    %826 = sbr.rel (0) target = $region33
  $region32: #{basic_block_forward.1} parent=0 // pred_region
    _
  $region33: #{basic_block_forward.1} parent=0 // pred_fallthru
    _
  // Predicated region
  $region34: #{basic_block_forward.1} parent=0 // pred_check
    _
  $region35: #{basic_block_forward.1} parent=0 // pred_check_branch
    %828 = sbr.rel (0) target = $region37
  $region36: #{basic_block_forward.1} parent=0 // pred_region
    _
  $region37: #{basic_block_forward.1} parent=0 // pred_fallthru
    _

</llo_original>
